<compile_context>
chip_gen: v6e
topology: v6e:2x2x1
jax: 0.10.0
libtpu: 0.0.40
codegen_flags: <defaults>
</compile_context>

<pallas_src>
import functools

import jax
import jax.numpy as jnp
from jax.experimental import pallas as pl
from jax.experimental.pallas import tpu as pltpu


def _round_up(x: int, m: int) -> int:
    return ((x + m - 1) // m) * m


def _attblock_kernel(x_ref, w_ref, b_ref, out_ref, natt_ref, cla_ref,
                     *, activation: str, approx_recip: bool,
                     matmul_dtype, trans_dtype):
    # Block shapes:
    #   x_ref:    (1, Cin, T)         current batch element (native dtype)
    #   w_ref:    (nco, 2*tn, Cin)    all fused weight tiles, VMEM-resident
    #   b_ref:    (nco, 2*tn, 1)      all fused bias tiles (f32), VMEM-resident
    #   out_ref:  (1, tn, 1)          attention-pooled output (f32)
    #   natt_ref: (1, tn, T)          softmax attention weights
    #   cla_ref:  (1, tn, T)          classification branch
    tn = natt_ref.shape[1]
    nco = w_ref.shape[0]
    j = pl.program_id(1) if nco > 1 else 0     # current Cout tile

    x = x_ref[0].astype(matmul_dtype)          # (Cin, T), in-kernel cast
    w = w_ref[j]                               # (2*tn, Cin), rows [0:tn]=att, [tn:]=cla
    b = b_ref[j]                               # (2*tn, 1) f32

    # Fused 1x1 convs: one MXU pass over x for both branches, f32 accumulation.
    y = jnp.dot(w, x, preferred_element_type=jnp.float32) + b     # (2*tn, T) f32
    att_logits = y[:tn, :]                                         # (tn, T)
    cla_logits = y[tn:, :]                                         # (tn, T)

    # Attention branch: tanh -> softmax over T (lane axis).
    # tanh bounds logits to [-1, 1] -> exp is safe without max-subtraction.
    e = jnp.exp(jnp.tanh(att_logits.astype(trans_dtype)))          # (tn, T)
    denom = jnp.sum(e.astype(jnp.float32), axis=1, keepdims=True)  # (tn, 1) f32
    inv = pl.reciprocal(denom, approx=approx_recip)                 # (tn, 1) f32
    norm_att = e.astype(jnp.float32) * inv                          # (tn, T) f32

    # Classification branch.
    if activation == "sigmoid":
        cla = jax.nn.sigmoid(cla_logits.astype(trans_dtype)).astype(jnp.float32)
    else:                                                           # 'linear'
        cla = cla_logits                                            # f32

    # Attention-weighted pooling over time (lane reduction), f32.
    pooled = jnp.sum(norm_att * cla, axis=1, keepdims=True)         # (tn, 1)

    out_ref[0] = pooled.astype(out_ref.dtype)
    natt_ref[0] = norm_att.astype(natt_ref.dtype)
    cla_ref[0] = cla.astype(cla_ref.dtype)


def att_block_v2(x_nct, w_att, b_att, w_cla, b_cla, activation="linear",
                 tn_cap=264, compute_dtype=jnp.bfloat16):
    """AttBlockV2 forward.

    x_nct: (B, Cin, T); weights (Cout, Cin, 1) and biases (Cout,) as in PyTorch.
    Returns (out (B, Cout) f32, norm_att (B, Cout, T), cla (B, Cout, T)).
    norm_att / cla are bfloat16 on the fast path, float32 when compute_dtype=f32.
    """
    B, Cin, T = x_nct.shape
    Cout = w_att.shape[0]

    cdt = jnp.dtype(compute_dtype)
    full_precision = cdt == jnp.dtype(jnp.float32)
    approx_recip = not full_precision
    trans_dtype = jnp.float32 if full_precision else cdt   # bf16 EUP on v6e/v7x
    big_out_dtype = jnp.float32 if full_precision else jnp.bfloat16

    # ---- Cout tiling: minimal padding, tn multiple of 8, capped at tn_cap -------
    Cout_pad8 = _round_up(Cout, 8)
    cap = max(8, _round_up(min(tn_cap, Cout_pad8), 8))
    nco = -(-Cout_pad8 // cap)                         # number of Cout tiles
    tn = _round_up(-(-Cout_pad8 // nco), 8)            # rows per tile
    Cout_pad = nco * tn

    # ---- weight / bias prep (do once at init in a real model) -------------------
    # Stack att/cla rows per Cout tile -> (nco, 2*tn, Cin): rows [0:tn] att, [tn:] cla.
    wa = jnp.zeros((Cout_pad, Cin), cdt).at[:Cout].set(w_att[:, :, 0].astype(cdt))
    wc = jnp.zeros((Cout_pad, Cin), cdt).at[:Cout].set(w_cla[:, :, 0].astype(cdt))
    w_cat = jnp.concatenate(
        [wa.reshape(nco, tn, Cin), wc.reshape(nco, tn, Cin)], axis=1)   # (nco, 2*tn, Cin)

    ba = jnp.zeros((Cout_pad,), jnp.float32).at[:Cout].set(b_att.astype(jnp.float32))
    bc = jnp.zeros((Cout_pad,), jnp.float32).at[:Cout].set(b_cla.astype(jnp.float32))
    b_cat = jnp.concatenate(
        [ba.reshape(nco, tn, 1), bc.reshape(nco, tn, 1)], axis=1)       # (nco, 2*tn, 1)

    kernel = functools.partial(
        _attblock_kernel, activation=activation, approx_recip=approx_recip,
        matmul_dtype=cdt, trans_dtype=trans_dtype)

    out_p, natt_p, cla_p = pl.pallas_call(
        kernel,
        out_shape=(
            jax.ShapeDtypeStruct((B, Cout_pad, 1), jnp.float32),
            jax.ShapeDtypeStruct((B, Cout_pad, T), big_out_dtype),
            jax.ShapeDtypeStruct((B, Cout_pad, T), big_out_dtype),
        ),
        grid_spec=pltpu.PrefetchScalarGridSpec(
            num_scalar_prefetch=0,
            # Cout tiles are the innermost axis: the x block index does not depend
            # on j, so x stays VMEM-resident across all Cout tiles.  The weight and
            # bias block indices are constant, so they are DMA'd exactly once.
            grid=(B, nco),
            in_specs=[
                pl.BlockSpec((1, Cin, T), lambda b, j: (b, 0, 0)),          # x
                pl.BlockSpec((nco, 2 * tn, Cin), lambda b, j: (0, 0, 0)),    # fused weights
                pl.BlockSpec((nco, 2 * tn, 1), lambda b, j: (0, 0, 0)),      # fused biases
            ],
            out_specs=[
                pl.BlockSpec((1, tn, 1), lambda b, j: (b, j, 0)),            # pooled out
                pl.BlockSpec((1, tn, T), lambda b, j: (b, j, 0)),            # norm_att
                pl.BlockSpec((1, tn, T), lambda b, j: (b, j, 0)),            # cla
            ],
        ),
        compiler_params=pltpu.CompilerParams(
            dimension_semantics=("parallel", "parallel"),
            vmem_limit_bytes=48 * 1024 * 1024,   # fits v7x (64 MiB physical) with headroom
        ),
    )(x_nct, w_cat, b_cat)

    # Outputs are already in PyTorch's NCW layout.  Skip the de-padding slice (an
    # extra read+write pass) when no padding was added.
    if Cout_pad != Cout:
        out = out_p[:, :Cout, 0]
        norm_att = natt_p[:, :Cout, :]
        cla = cla_p[:, :Cout, :]
    else:
        out = out_p[:, :, 0]
        norm_att = natt_p
        cla = cla_p
    return out, norm_att, cla


def _xavier_uniform_conv1d(key, out_features, in_features):
    # PyTorch xavier_uniform_ on a Conv1d weight (out, in, 1).
    bound = (6.0 / (in_features + out_features)) ** 0.5
    return jax.random.uniform(
        key, (out_features, in_features, 1), jnp.float32, -bound, bound)


def _reference(x_nct, w_att, b_att, w_cla, b_cla, activation):
    # Pure-JAX reference matching the PyTorch forward.
    att = jnp.einsum("oik,bit->bot", w_att, x_nct) + b_att[None, :, None]
    norm_att = jax.nn.softmax(jnp.tanh(att), axis=-1)
    cla = jnp.einsum("oik,bit->bot", w_cla, x_nct) + b_cla[None, :, None]
    if activation == "sigmoid":
        cla = jax.nn.sigmoid(cla)
    out = jnp.sum(norm_att * cla, axis=2)
    return out, norm_att, cla


if __name__ == "__main__":
    key = jax.random.PRNGKey(0)
    k_x, k_wa, k_wc, k_x2, k_wa2, k_wc2 = jax.random.split(key, 6)

    # ---- Case 1: single Cout tile, sigmoid activation ---------------------------
    B, Cin, Cout, T = 2, 32, 8, 16
    x = jax.random.normal(k_x, (B, Cin, T), jnp.float32)
    w_att = _xavier_uniform_conv1d(k_wa, Cout, Cin)
    w_cla = _xavier_uniform_conv1d(k_wc, Cout, Cin)
    b_att = jnp.zeros((Cout,), jnp.float32)   # init_layer fills bias with 0
    b_cla = jnp.zeros((Cout,), jnp.float32)

    ref = _reference(x, w_att, b_att, w_cla, b_cla, "sigmoid")

    # Full-precision path: exact reciprocal, f32 transcendentals, tight check.
    r32 = att_block_v2(x, w_att, b_att, w_cla, b_cla, "sigmoid",
                       compute_dtype=jnp.float32)
    jax.block_until_ready(r32)
    assert r32[0].shape == (B, Cout)
    assert r32[1].shape == (B, Cout, T)
    assert r32[2].shape == (B, Cout, T)
    for got, want in zip(r32, ref):
        assert jnp.allclose(got, want, atol=1e-5, rtol=1e-5)

    # Fast path (default): bf16 matmul/transcendentals, bf16 big outputs, approx recip.
    rbf = att_block_v2(x, w_att, b_att, w_cla, b_cla, "sigmoid")
    jax.block_until_ready(rbf)
    for got, want in zip(rbf, ref):
        assert got.shape == want.shape
        assert jnp.allclose(got.astype(jnp.float32), want, atol=5e-2, rtol=5e-2)

    # ---- Case 2: multiple Cout tiles + Cout padding, linear activation ----------
    # (exercises the resident-weight dynamic tile slice and the de-pad slice).
    Cout2 = 20
    x2 = jax.random.normal(k_x2, (B, Cin, T), jnp.float32)
    w_att2 = _xavier_uniform_conv1d(k_wa2, Cout2, Cin)
    w_cla2 = _xavier_uniform_conv1d(k_wc2, Cout2, Cin)
    b_att2 = jnp.zeros((Cout2,), jnp.float32)
    b_cla2 = jnp.zeros((Cout2,), jnp.float32)

    ref2 = _reference(x2, w_att2, b_att2, w_cla2, b_cla2, "linear")
    r2 = att_block_v2(x2, w_att2, b_att2, w_cla2, b_cla2, "linear",
                      tn_cap=8, compute_dtype=jnp.float32)
    jax.block_until_ready(r2)
    assert r2[0].shape == (B, Cout2)
    assert r2[1].shape == (B, Cout2, T)
    assert r2[2].shape == (B, Cout2, T)
    for got, want in zip(r2, ref2):
        assert jnp.allclose(got, want, atol=1e-5, rtol=1e-5)

    print("KERNEL_OK")
</pallas_src>

<mosaic_0001>
module attributes {stable_mosaic.version = 11 : i64} {
  func.func @_attblock_kernel(%arg0: i32, %arg1: i32, %arg2: memref<1x32x16xf32, #tpu.memory_space<vmem>>, %arg3: memref<1x16x32xf32, #tpu.memory_space<vmem>>, %arg4: memref<1x16x1xf32, #tpu.memory_space<vmem>>, %arg5: memref<1x8x1xf32, #tpu.memory_space<vmem>>, %arg6: memref<1x8x16xf32, #tpu.memory_space<vmem>>, %arg7: memref<1x8x16xf32, #tpu.memory_space<vmem>>) attributes {dimension_semantics = [#tpu.dimension_semantics<parallel>, #tpu.dimension_semantics<parallel>], iteration_bounds = array<i64: 2, 1>, scalar_prefetch = 0 : i64, scratch_operands = 0 : i64, tpu.core_type = #tpu.core_type<tc>, window_params = [{transform_indices = @transform_0, window_bounds = array<i64: 1, 32, 16>}, {pipeline_mode = #tpu.pipeline_mode<synchronous>, transform_indices = @transform_1, window_bounds = array<i64: 1, 16, 32>}, {pipeline_mode = #tpu.pipeline_mode<synchronous>, transform_indices = @transform_2, window_bounds = array<i64: 1, 16, 1>}, {transform_indices = @transform_3, window_bounds = array<i64: 1, 8, 1>}, {transform_indices = @transform_4, window_bounds = array<i64: 1, 8, 16>}, {transform_indices = @transform_5, window_bounds = array<i64: 1, 8, 16>}]} {
    %c0 = arith.constant 0 : index
    %c0_0 = arith.constant 0 : index
    %c0_1 = arith.constant 0 : index
    %0 = vector.load %arg2[%c0, %c0_0, %c0_1] : memref<1x32x16xf32, #tpu.memory_space<vmem>>, vector<1x32x16xf32>
    %1 = vector.shape_cast %0 : vector<1x32x16xf32> to vector<32x16xf32>
    %c0_2 = arith.constant 0 : index
    %c0_3 = arith.constant 0 : index
    %c0_4 = arith.constant 0 : index
    %2 = vector.load %arg3[%c0_2, %c0_3, %c0_4] : memref<1x16x32xf32, #tpu.memory_space<vmem>>, vector<1x16x32xf32>
    %3 = vector.shape_cast %2 : vector<1x16x32xf32> to vector<16x32xf32>
    %c0_5 = arith.constant 0 : index
    %c0_6 = arith.constant 0 : index
    %c0_7 = arith.constant 0 : index
    %4 = vector.load %arg4[%c0_5, %c0_6, %c0_7] : memref<1x16x1xf32, #tpu.memory_space<vmem>>, vector<1x16x1xf32>
    %5 = vector.shape_cast %4 : vector<1x16x1xf32> to vector<16x1xf32>
    %cst = arith.constant dense<0.000000e+00> : vector<16x16xf32>
    %6 = tpu.matmul %3, %1, %cst {dimension_numbers = #tpu.dot_dimension_numbers<[1], [0], [0], [1], [0, 0, 1, 1], [], []>} : vector<16x32xf32>, vector<32x16xf32>, vector<16x16xf32> -> vector<16x16xf32>
    %7 = vector.broadcast %5 : vector<16x1xf32> to vector<16x16xf32>
    %8 = arith.addf %6, %7 : vector<16x16xf32>
    %9 = vector.extract_strided_slice %8 {offsets = [0, 0], sizes = [8, 16], strides = [1, 1]} : vector<16x16xf32> to vector<8x16xf32>
    %10 = vector.extract_strided_slice %8 {offsets = [8, 0], sizes = [8, 16], strides = [1, 1]} : vector<16x16xf32> to vector<8x16xf32>
    %11 = math.tanh %9 : vector<8x16xf32>
    %12 = math.exp %11 : vector<8x16xf32>
    %cst_8 = arith.constant dense<0.000000e+00> : vector<8xf32>
    %13 = vector.multi_reduction <add>, %12, %cst_8 [1] : vector<8x16xf32> to vector<8xf32>
    %14 = vector.shape_cast %13 : vector<8xf32> to vector<8x1xf32>
    %15 = tpu.reciprocal %14 : vector<8x1xf32> -> vector<8x1xf32>
    %16 = vector.broadcast %15 : vector<8x1xf32> to vector<8x16xf32>
    %17 = arith.mulf %12, %16 : vector<8x16xf32>
    %18 = arith.negf %10 : vector<8x16xf32>
    %19 = math.exp %18 : vector<8x16xf32>
    %cst_9 = arith.constant 1.000000e+00 : f32
    %20 = vector.broadcast %cst_9 : f32 to vector<8x16xf32>
    %21 = arith.addf %20, %19 : vector<8x16xf32>
    %22 = arith.divf %20, %21 : vector<8x16xf32>
    %23 = arith.mulf %17, %22 : vector<8x16xf32>
    %cst_10 = arith.constant dense<0.000000e+00> : vector<8xf32>
    %24 = vector.multi_reduction <add>, %23, %cst_10 [1] : vector<8x16xf32> to vector<8xf32>
    %25 = vector.shape_cast %24 : vector<8xf32> to vector<8x1xf32>
    %c0_11 = arith.constant 0 : index
    %c0_12 = arith.constant 0 : index
    %c0_13 = arith.constant 0 : index
    %26 = vector.load %arg5[%c0_11, %c0_12, %c0_13] : memref<1x8x1xf32, #tpu.memory_space<vmem>>, vector<1x8x1xf32>
    %27 = vector.shape_cast %26 : vector<1x8x1xf32> to vector<8x1xf32>
    %28 = vector.shape_cast %25 : vector<8x1xf32> to vector<1x8x1xf32>
    tpu.vector_store %arg5[%c0_11, %c0_12, %c0_13], %28 {strides = array<i32>} : memref<1x8x1xf32, #tpu.memory_space<vmem>>, vector<1x8x1xf32>,
    %c0_14 = arith.constant 0 : index
    %c0_15 = arith.constant 0 : index
    %c0_16 = arith.constant 0 : index
    %29 = vector.load %arg6[%c0_14, %c0_15, %c0_16] : memref<1x8x16xf32, #tpu.memory_space<vmem>>, vector<1x8x16xf32>
    %30 = vector.shape_cast %29 : vector<1x8x16xf32> to vector<8x16xf32>
    %31 = vector.shape_cast %17 : vector<8x16xf32> to vector<1x8x16xf32>
    tpu.vector_store %arg6[%c0_14, %c0_15, %c0_16], %31 {strides = array<i32>} : memref<1x8x16xf32, #tpu.memory_space<vmem>>, vector<1x8x16xf32>,
    %c0_17 = arith.constant 0 : index
    %c0_18 = arith.constant 0 : index
    %c0_19 = arith.constant 0 : index
    %32 = vector.load %arg7[%c0_17, %c0_18, %c0_19] : memref<1x8x16xf32, #tpu.memory_space<vmem>>, vector<1x8x16xf32>
    %33 = vector.shape_cast %32 : vector<1x8x16xf32> to vector<8x16xf32>
    %34 = vector.shape_cast %22 : vector<8x16xf32> to vector<1x8x16xf32>
    tpu.vector_store %arg7[%c0_17, %c0_18, %c0_19], %34 {strides = array<i32>} : memref<1x8x16xf32, #tpu.memory_space<vmem>>, vector<1x8x16xf32>,
    return
  }
  func.func @transform_0(%arg0: i32, %arg1: i32) -> (i32, i32, i32) {
    %c0_i32 = arith.constant 0 : i32
    %c0_i32_0 = arith.constant 0 : i32
    %c0_i32_1 = arith.constant 0 : i32
    return %arg0, %c0_i32, %c0_i32_0 : i32, i32, i32
  }
  func.func @transform_1(%arg0: i32, %arg1: i32) -> (i32, i32, i32) {
    %c0_i32 = arith.constant 0 : i32
    %c0_i32_0 = arith.constant 0 : i32
    %c0_i32_1 = arith.constant 0 : i32
    %c0_i32_2 = arith.constant 0 : i32
    return %c0_i32, %c0_i32_0, %c0_i32_1 : i32, i32, i32
  }
  func.func @transform_2(%arg0: i32, %arg1: i32) -> (i32, i32, i32) {
    %c0_i32 = arith.constant 0 : i32
    %c0_i32_0 = arith.constant 0 : i32
    %c0_i32_1 = arith.constant 0 : i32
    %c0_i32_2 = arith.constant 0 : i32
    return %c0_i32, %c0_i32_0, %c0_i32_1 : i32, i32, i32
  }
  func.func @transform_3(%arg0: i32, %arg1: i32) -> (i32, i32, i32) {
    %c0_i32 = arith.constant 0 : i32
    %c0_i32_0 = arith.constant 0 : i32
    return %arg0, %arg1, %c0_i32 : i32, i32, i32
  }
  func.func @transform_4(%arg0: i32, %arg1: i32) -> (i32, i32, i32) {
    %c0_i32 = arith.constant 0 : i32
    %c0_i32_0 = arith.constant 0 : i32
    return %arg0, %arg1, %c0_i32 : i32, i32, i32
  }
  func.func @transform_5(%arg0: i32, %arg1: i32) -> (i32, i32, i32) {
    %c0_i32 = arith.constant 0 : i32
    %c0_i32_0 = arith.constant 0 : i32
    return %arg0, %arg1, %c0_i32 : i32, i32, i32
  }
}

</mosaic_0001>

<llo_original>
// kernel: tpu_custom_call.1
$region0: #{tpu_custom_call.1}
  #allocation0 [shape = 'u32[]', space=smem, size = 0x4, offset = 0x4, fixed_abs, tag = 'smem constant byte address 0x4 - core index']
  #allocation1 [shape = 'u32[144,128]{1,0:T(1,128)}', space=vmem, size = 0x12000, scoped, tag = 'internal scratch']
  %s0 = inlined_call_operand.vmem [shape: f32[2,32,16], index: 0, kind: input, shape index: {}]
  %s1 = inlined_call_operand.vmem [shape: f32[1,16,32], index: 1, kind: input, shape index: {}]
  %s2 = inlined_call_operand.vmem [shape: f32[1,16,1], index: 2, kind: input, shape index: {}]
  %s3 = inlined_call_operand.vmem [shape: f32[2,8,1], index: 3, kind: output, shape index: {0}]
  %s4 = inlined_call_operand.hbm [shape: f32[2,8,16], index: 4, kind: output, shape index: {1}]
  %s5 = inlined_call_operand.hbm [shape: f32[2,8,16], index: 5, kind: output, shape index: {2}]
  %6 = xla_tuple %s3, %s4, %s5
  %s7 = sld [smem:[#allocation0]]
  $region61: #{tpu_custom_call.1} parent=0
    _
  %s9 = ssub.s32 1, %s7
  %s10 = scalar_select 0, %s9, %s7
  $region1: #{tpu_custom_call.1} parent=0
    #allocation2 [shape = 'u8[8192]{0}', space=vmem, size = 0x2000, scoped, tag = 'output window, operand 1']
    #allocation3 [shape = 's32[2]{0}', space=sflag, size = 0x8, scoped, tag = 'scoped memory for tpu_custom_call.1']
    #allocation4 [shape = 'u8[8192]{0}', space=vmem, size = 0x2000, scoped, tag = 'output window, operand 2']
    #allocation5 [shape = 's32[2]{0}', space=sflag, size = 0x8, scoped, tag = 'scoped memory for tpu_custom_call.1']
    %11 = vsyncpa [#allocation3], 0
    %s12 = scalar_lea.sflag [#allocation3], 1
    %13 = vsyncpa %s12, 0
    %14 = vsyncpa [#allocation5], 0
    %s15 = scalar_lea.sflag [#allocation5], 1
    %16 = vsyncpa %s15, 0
    loop: start=0, step=1, limit=4
    $region2: #{tpu_custom_call.1} parent=1 // loop_pre_header
      _
    $region3: #{tpu_custom_call.1} parent=1 // loop_header
      %s18 = sphi 0, %s22
      %p19 = scmp.ge.s32.totalorder %s18, 4
      %s25 = sphi 0, %s37
      %s26 = sphi 0, %s33
      %s27 = sphi 0, %s25
      %s28 = sphi 0, %s26
      %s29 = sphi 0, %s27
      %s30 = sphi 0, %s28
      %s40 = sphi 0, %s42
      %s43 = sphi 0, %s40
      %s44 = sphi 0, %s43
      %s60 = sphi 0, %s44
      %s64 = sphi 0, %s64
      %s66 = sphi 0, %s64
      %s67 = sphi 0, %s66
      %s81 = sphi 0, %s67
      %s85 = sphi 0, %s85
      %s87 = sphi 0, %s85
      %s88 = sphi 0, %s87
      %s102 = sphi 0, %s88
      %s110 = sphi 0, %s112
      %s113 = sphi 0, %s110
      %s114 = sphi 0, %s113
      %s130 = sphi 0, %s114
      %s138 = sphi 0, %s140
      %s141 = sphi 0, %s138
      %s142 = sphi 0, %s141
      %s158 = sphi 0, %s142
      %s166 = sphi 0, %s168
      %s169 = sphi 0, %s166
      %s170 = sphi 0, %s169
      %s186 = sphi 0, %s170
    $region4: #{tpu_custom_call.1} parent=1 // loop_header_branch
      %21 = sbr.rel (%p19) target = $region8
    $region5: #{tpu_custom_call.1} parent=1 // loop_body
      %s23 = ssub.s32 %s18, 1
      %s24 = ssub.s32 %s18, 2
      %s31 = sadd.s32 1, %s26
      %p32 = scmp.ge.s32.totalorder %s31, 1
      %s33 = scalar_select %p32, 0, %s31
      %s34 = sadd.s32 1, %s25
      %s35 = scalar_select %p32, %s34, %s25
      %p36 = scmp.ge.s32.totalorder %s35, 2
      %s37 = scalar_select %p36, 0, %s35
      %s38 = ssub.s32 %s25, %s37
      %p39 = scmp.eq.s32.totalorder %s38, 0
      %s41 = sadd.s32 %s40, 1
      %s42 = scalar_select %p39, %s40, %s41
      %p45 = pneg %p39
      %p46 = scmp.eq.s32.totalorder %s18, 1
      %p47 = por %p45, %p46
      %p48 = scmp.ne.s32.totalorder %s40, %s43
      %p49 = scmp.eq.s32.totalorder %s18, 0
      %p50 = por %p48, %p49
      %p51 = scmp.ne.s32.totalorder %s40, %s43
      %p52 = scmp.eq.s32.totalorder %s23, 1
      %p53 = por %p51, %p52
      %p54 = scmp.ne.s32.totalorder %s43, %s44
      %p55 = scmp.eq.s32.totalorder %s23, 0
      %p56 = por %p54, %p55
      %p57 = scmp.ne.s32.totalorder %s43, %s44
      %p58 = scmp.eq.s32.totalorder %s24, 1
      %p59 = por %p57, %p58
      %p61 = scmp.ne.s32.totalorder %s44, %s60
      %p62 = scmp.eq.s32.totalorder %s24, 0
      %p63 = por %p61, %p62
      %s65 = sadd.s32 %s64, 1
      %p68 = scmp.eq.s32.totalorder %s18, 1
      %p69 = scmp.ne.s32.totalorder %s64, %s66
      %p70 = scmp.eq.s32.totalorder %s18, 0
      %p71 = por %p69, %p70
      %p72 = scmp.ne.s32.totalorder %s64, %s66
      %p73 = scmp.eq.s32.totalorder %s23, 1
      %p74 = por %p72, %p73
      %p75 = scmp.ne.s32.totalorder %s66, %s67
      %p76 = scmp.eq.s32.totalorder %s23, 0
      %p77 = por %p75, %p76
      %p78 = scmp.ne.s32.totalorder %s66, %s67
      %p79 = scmp.eq.s32.totalorder %s24, 1
      %p80 = por %p78, %p79
      %p82 = scmp.ne.s32.totalorder %s67, %s81
      %p83 = scmp.eq.s32.totalorder %s24, 0
      %p84 = por %p82, %p83
      %s86 = sadd.s32 %s85, 1
      %p89 = scmp.eq.s32.totalorder %s18, 1
      %p90 = scmp.ne.s32.totalorder %s85, %s87
      %p91 = scmp.eq.s32.totalorder %s18, 0
      %p92 = por %p90, %p91
      %p93 = scmp.ne.s32.totalorder %s85, %s87
      %p94 = scmp.eq.s32.totalorder %s23, 1
      %p95 = por %p93, %p94
      %p96 = scmp.ne.s32.totalorder %s87, %s88
      %p97 = scmp.eq.s32.totalorder %s23, 0
      %p98 = por %p96, %p97
      %p99 = scmp.ne.s32.totalorder %s87, %s88
      %p100 = scmp.eq.s32.totalorder %s24, 1
      %p101 = por %p99, %p100
      %p103 = scmp.ne.s32.totalorder %s88, %s102
      %p104 = scmp.eq.s32.totalorder %s24, 0
      %p105 = por %p103, %p104
      %s106 = ssub.s32 %s25, %s37
      %s107 = ssub.s32 %s26, %s33
      %s108 = sor.u32 %s106, %s107
      %p109 = scmp.eq.s32.totalorder %s108, 0
      %s111 = sadd.s32 %s110, 1
      %s112 = scalar_select %p109, %s110, %s111
      %p115 = pneg %p109
      %p116 = scmp.eq.s32.totalorder %s18, 1
      %p117 = por %p115, %p116
      %p118 = scmp.ne.s32.totalorder %s110, %s113
      %p119 = scmp.eq.s32.totalorder %s18, 0
      %p120 = por %p118, %p119
      %p121 = scmp.ne.s32.totalorder %s110, %s113
      %p122 = scmp.eq.s32.totalorder %s23, 1
      %p123 = por %p121, %p122
      %p124 = scmp.ne.s32.totalorder %s113, %s114
      %p125 = scmp.eq.s32.totalorder %s23, 0
      %p126 = por %p124, %p125
      %p127 = scmp.ne.s32.totalorder %s113, %s114
      %p128 = scmp.eq.s32.totalorder %s24, 1
      %p129 = por %p127, %p128
      %p131 = scmp.ne.s32.totalorder %s114, %s130
      %p132 = scmp.eq.s32.totalorder %s24, 0
      %p133 = por %p131, %p132
      %s134 = ssub.s32 %s25, %s37
      %s135 = ssub.s32 %s26, %s33
      %s136 = sor.u32 %s134, %s135
      %p137 = scmp.eq.s32.totalorder %s136, 0
      %s139 = sadd.s32 %s138, 1
      %s140 = scalar_select %p137, %s138, %s139
      %p143 = pneg %p137
      %p144 = scmp.eq.s32.totalorder %s18, 1
      %p145 = por %p143, %p144
      %p146 = scmp.ne.s32.totalorder %s138, %s141
      %p147 = scmp.eq.s32.totalorder %s18, 0
      %p148 = por %p146, %p147
      %p149 = scmp.ne.s32.totalorder %s138, %s141
      %p150 = scmp.eq.s32.totalorder %s23, 1
      %p151 = por %p149, %p150
      %p152 = scmp.ne.s32.totalorder %s141, %s142
      %p153 = scmp.eq.s32.totalorder %s23, 0
      %p154 = por %p152, %p153
      %p155 = scmp.ne.s32.totalorder %s141, %s142
      %p156 = scmp.eq.s32.totalorder %s24, 1
      %p157 = por %p155, %p156
      %p159 = scmp.ne.s32.totalorder %s142, %s158
      %p160 = scmp.eq.s32.totalorder %s24, 0
      %p161 = por %p159, %p160
      %s162 = ssub.s32 %s25, %s37
      %s163 = ssub.s32 %s26, %s33
      %s164 = sor.u32 %s162, %s163
      %p165 = scmp.eq.s32.totalorder %s164, 0
      %s167 = sadd.s32 %s166, 1
      %s168 = scalar_select %p165, %s166, %s167
      %p171 = pneg %p165
      %p172 = scmp.eq.s32.totalorder %s18, 1
      %p173 = por %p171, %p172
      %p174 = scmp.ne.s32.totalorder %s166, %s169
      %p175 = scmp.eq.s32.totalorder %s18, 0
      %p176 = por %p174, %p175
      %p177 = scmp.ne.s32.totalorder %s166, %s169
      %p178 = scmp.eq.s32.totalorder %s23, 1
      %p179 = por %p177, %p178
      %p180 = scmp.ne.s32.totalorder %s169, %s170
      %p181 = scmp.eq.s32.totalorder %s23, 0
      %p182 = por %p180, %p181
      %p183 = scmp.ne.s32.totalorder %s169, %s170
      %p184 = scmp.eq.s32.totalorder %s24, 1
      %p185 = por %p183, %p184
      %p187 = scmp.ne.s32.totalorder %s170, %s186
      %p188 = scmp.eq.s32.totalorder %s24, 0
      %p189 = por %p187, %p188
      %p190 = scmp.le.s32.totalorder 1, %s18
      %p191 = scmp.lt.s32.totalorder %s18, 3
      %p192 = pnand %p190, %p191
      %p193 = pneg %p192
      // Predicated region
      $region9: #{tpu_custom_call.1} parent=5 // pred_check
        _
      $region10: #{tpu_custom_call.1} parent=5 // pred_check_branch
        %195 = sbr.rel (%p192) target = $region12
      $region11: #{tpu_custom_call.1} parent=5 // pred_region
        %s196 = ssub.s32 %s18, 1
        // Predicated region
        $region13: #{tpu_custom_call.1} parent=11 // pred_check
          %p197 = pneg %p77
        $region14: #{tpu_custom_call.1} parent=11 // pred_check_branch
          %199 = sbr.rel (%p197) target = $region16
        $region15: #{tpu_custom_call.1} parent=11 // pred_region
          _
        $region16: #{tpu_custom_call.1} parent=11 // pred_fallthru
          _
        // Predicated region
        $region17: #{tpu_custom_call.1} parent=11 // pred_check
          %p200 = pneg %p98
        $region18: #{tpu_custom_call.1} parent=11 // pred_check_branch
          %202 = sbr.rel (%p200) target = $region20
        $region19: #{tpu_custom_call.1} parent=11 // pred_region
          _
        $region20: #{tpu_custom_call.1} parent=11 // pred_fallthru
          _
      $region12: #{tpu_custom_call.1} parent=5 // pred_fallthru
        _
      %p203 = scmp.lt.s32.totalorder %s18, 2
      // Predicated region
      $region21: #{tpu_custom_call.1} parent=5 // pred_check
        %p204 = pneg %p203
      $region22: #{tpu_custom_call.1} parent=5 // pred_check_branch
        %206 = sbr.rel (%p204) target = $region24
      $region23: #{tpu_custom_call.1} parent=5 // pred_region
        // Predicated region
        $region25: #{tpu_custom_call.1} parent=23 // pred_check
          %p207 = pneg %p50
        $region26: #{tpu_custom_call.1} parent=23 // pred_check_branch
          %209 = sbr.rel (%p207) target = $region28
        $region27: #{tpu_custom_call.1} parent=23 // pred_region
          %p210 = scmp.lt.s32.totalorder %s25, 1
          %s211 = scalar_select %p210, %s25, 1
          %s212 = smul.addr %s211, 4
          %s213 = smul.addr %s212, 8
          %s214 = scalar_lea.vmem %s0, %s213
        $region28: #{tpu_custom_call.1} parent=23 // pred_fallthru
          _
      $region24: #{tpu_custom_call.1} parent=5 // pred_fallthru
        _
      %p215 = scmp.le.s32.totalorder 1, %s18
      %p216 = scmp.lt.s32.totalorder %s18, 3
      %p217 = pnand %p215, %p216
      %p218 = pneg %p217
      // Predicated region
      $region29: #{tpu_custom_call.1} parent=5 // pred_check
        _
      $region30: #{tpu_custom_call.1} parent=5 // pred_check_branch
        %220 = sbr.rel (%p217) target = $region32
      $region31: #{tpu_custom_call.1} parent=5 // pred_region
        %s221 = ssub.s32 %s18, 1
        %p222 = scmp.lt.s32.totalorder %s27, 1
        %s223 = scalar_select %p222, %s27, 1
        %s224 = smul.addr %s223, 4
        %s225 = smul.addr %s224, 8
        %s226 = scalar_lea.vmem %s0, %s225
        %p227 = pneg %p56
        %p228 = pneg %p53
        %p229 = pneg %p77
        %p230 = pneg %p74
        %p231 = pneg %p98
        %p232 = pneg %p95
        %p233 = pneg %p126
        %p234 = pneg %p123
        %p235 = scmp.lt.s32.totalorder %s27, 1
        %s236 = scalar_select %p235, %s27, 1
        %p237 = scmp.lt.s32.totalorder %s28, 0
        %s238 = scalar_select %p237, %s28, 0
        %s239 = sadd.s32 %s238, %s236
        %s240 = smul.addr %s239, 8
        %s241 = scalar_lea.vmem %s3, %s240
        %p242 = pneg %p154
        %p243 = pneg %p151
        %s244 = sand.u32 %s141, 1
        %s245 = scalar_lea.sflag [#allocation3], %s244
        %s246 = sand.u32 %s141, 1
        %s247 = smul.addr %s246, 8
        %s248 = scalar_lea.vmem [#allocation2], %s247
        %p249 = pneg %p182
        %p250 = pneg %p179
        %s251 = sand.u32 %s169, 1
        %s252 = scalar_lea.sflag [#allocation5], %s251
        %s253 = sand.u32 %s169, 1
        %s254 = smul.addr %s253, 8
        %s255 = scalar_lea.vmem [#allocation4], %s254
        %p256 = scmp.lt.s32.totalorder %s27, 1
        %s257 = scalar_select %p256, %s27, 1
        %s258 = smul.addr %s257, 4
        %s259 = smul.addr %s258, 8
        %s260 = scalar_lea.vmem %s0, %s259
        %p261 = scmp.lt.s32.totalorder %s27, 1
        %s262 = scalar_select %p261, %s27, 1
        %p263 = scmp.lt.s32.totalorder %s28, 0
        %s264 = scalar_select %p263, %s28, 0
        %s265 = sadd.s32 %s264, %s262
        %s266 = smul.addr %s265, 8
        %s267 = scalar_lea.vmem %s3, %s266
        %v268 = vld [vmem:[%s260] sm:$0xff]
        %v269 = vld [vmem:[%s260 + $0x8] sm:$0xff]
        %v270 = vld [vmem:[%s260 + $0x10] sm:$0xff]
        %v271 = vld [vmem:[%s260 + $0x18] sm:$0xff]
        %v272 = vld [vmem:[%s1] sm:$0xff]
        %v273 = vld [vmem:[%s1 + $0x8] sm:$0xff]
        %v274 = vld [vmem:[%s2] sm:$0xff]
        %v275 = vld [vmem:[%s2 + $0x8] sm:$0xff]
        %277 = vset.pattern.permute.xlu0 0
        %278 = vperm.xlu0 %277, %v274
        %v279 = vpop.permute.xlu0 %278
        %282 = vset.pattern.permute.xlu0 0
        %283 = vperm.xlu0 %282, %v275
        %v284 = vpop.permute.xlu0 %283
        %vm286 = vcmask 261120
        %v288 = vsel %vm286, %v272, 0
        %v291 = vsel %vm286, %v273, 0
        %293 = vmatprep.subr.mxu0 0.0
        %294 = vmatpush1.msra.mxu0 0.0
        %295 = vmatprep.subr.mxu0 0.0
        %296 = vmatpush1.msra.mxu0 0.0
        %297 = vmatprep.subr.mxu0 0.0
        %298 = vmatpush1.msra.mxu0 0.0
        %299 = vmatprep.subr.mxu0 0.0
        %300 = vmatpush1.msra.mxu0 0.0
        %301 = vmatprep.subr.mxu0 0.0
        %302 = vmatpush1.msra.mxu0 0.0
        %303 = vmatprep.subr.mxu0 0.0
        %304 = vmatpush1.msra.mxu0 0.0
        %305 = vmatprep.subr.mxu0 0.0
        %306 = vmatpush1.msra.mxu0 0.0
        %307 = vmatprep.subr.mxu0 0.0
        %308 = vmatpush1.msra.mxu0 0.0
        %309 = vmatprep.subr.mxu0 0.0
        %310 = vmatpush1.msra.mxu0 0.0
        %311 = vmatprep.subr.mxu0 0.0
        %312 = vmatpush1.msra.mxu0 0.0
        %313 = vmatprep.subr.mxu0 0.0
        %314 = vmatpush1.msra.mxu0 0.0
        %315 = vmatprep.subr.mxu0 0.0
        %316 = vmatpush1.msra.mxu0 0.0
        %317 = vmatprep.subr.mxu0 0.0
        %318 = vmatpush1.msra.mxu0 %v271
        %319 = vmatprep.subr.mxu0 0.0
        %320 = vmatpush1.msra.mxu0 %v270
        %321 = vmatprep.subr.mxu0 0.0
        %322 = vmatpush1.msra.mxu0 %v269
        %323 = vmatprep.subr.mxu0 0.0
        %324 = vmatpush1.msra.mxu0 %v268
        %325 = vmatprep.subr.mxu0 0.0
        %326 = vmatpush2.msra.mxu0 0.0
        %327 = vmatprep.subr.mxu0 0.0
        %328 = vmatpush2.msra.mxu0 0.0
        %329 = vmatprep.subr.mxu0 0.0
        %330 = vmatpush2.msra.mxu0 0.0
        %331 = vmatprep.subr.mxu0 0.0
        %332 = vmatpush2.msra.mxu0 0.0
        %333 = vmatprep.subr.mxu0 0.0
        %334 = vmatpush2.msra.mxu0 0.0
        %335 = vmatprep.subr.mxu0 0.0
        %336 = vmatpush2.msra.mxu0 0.0
        %337 = vmatprep.subr.mxu0 0.0
        %338 = vmatpush2.msra.mxu0 0.0
        %339 = vmatprep.subr.mxu0 0.0
        %340 = vmatpush2.msra.mxu0 0.0
        %341 = vmatprep.subr.mxu0 0.0
        %342 = vmatpush2.msra.mxu0 0.0
        %343 = vmatprep.subr.mxu0 0.0
        %344 = vmatpush2.msra.mxu0 0.0
        %345 = vmatprep.subr.mxu0 0.0
        %346 = vmatpush2.msra.mxu0 0.0
        %347 = vmatprep.subr.mxu0 0.0
        %348 = vmatpush2.msra.mxu0 0.0
        %349 = vmatprep.subr.mxu0 0.0
        %350 = vmatpush2.msra.mxu0 0.0
        %351 = vmatprep.subr.mxu0 0.0
        %352 = vmatpush2.msra.mxu0 0.0
        %353 = vmatprep.subr.mxu0 0.0
        %354 = vmatpush2.msra.mxu0 0.0
        %355 = vmatprep.subr.mxu0 0.0
        %356 = vmatpush2.msra.mxu0 0.0
        %357 = vmatprep.mubr.f32.mxu0 0.0
        %358 = vmatmul.mubr.f32.gmra.mxu0 %v288
        %v359 = vpop.f32.mrf.mxu0
        %v360 = vadd.f32 %v279, %v359
        %v361 = vpop.f32.mrf.mxu0
        %362 = vmatprep.mubr.f32.mxu0 0.0
        %363 = vmatmul.mubr.f32.gmra.mxu0 %v291
        %v364 = vpop.f32.mrf.mxu0
        %v365 = vadd.f32 %v284, %v364
        %v366 = vpop.f32.mrf.mxu0
        %367 = vdwg.mxu0
        %v368 = vtanh.pop %v360
        %v369 = vmul.f32 %v368, 1.442695
        %v370 = vpow.pop %v369
        %vm371 = vcmask 130048
        %v372 = vsel %vm371, %v370, 0.0
        %373 = vadd.xlane.f32.xlu0 %v372
        %v374 = vpop.xlane.xlu0 %373
        %v375 = vrcp.pop %v374
        %v376 = vmul.f32 %v370, %v375
        %v377 = vxor.u32 %v365, 2147483648
        %v378 = vmul.f32 %v377, 1.442695
        %v379 = vpow.pop %v378
        %v380 = vadd.f32 %v379, 1.0
        %v381 = vrcp.pop %v380
        %v382 = vmul.f32 1.0, %v381
        %v383 = vmul.f32 %v376, %v382
        %v384 = vsel %vm371, %v383, 0.0
        %385 = vadd.xlane.f32.xlu0 %v384
        %v386 = vpop.xlane.xlu0 %385
        %vm387 = vcmask 7168
        %388 = vst.msk [vmem:[%s267] sm:$0xff] %vm387, %v386
        %389 = vst.msk [vmem:[%s248] sm:$0xff] %vm371, %v376
        %390 = vst.msk [vmem:[%s255] sm:$0xff] %vm371, %v382
        %p391 = scmp.lt.s32.totalorder %s27, 1
        %s392 = scalar_select %p391, %s27, 1
        %p393 = scmp.lt.s32.totalorder %s28, 0
        %s394 = scalar_select %p393, %s28, 0
        %s395 = sadd.s32 %s394, %s392
        %s396 = smul.addr %s395, 8
        %s397 = scalar_lea.vmem %s3, %s396
        %s398 = sand.u32 %s141, 1
        %s399 = scalar_lea.sflag [#allocation3], %s398
        %s400 = sand.u32 %s141, 1
        %s401 = smul.addr %s400, 8
        %s402 = scalar_lea.vmem [#allocation2], %s401
        %s403 = sand.u32 %s169, 1
        %s404 = scalar_lea.sflag [#allocation5], %s403
        %s405 = sand.u32 %s169, 1
        %s406 = smul.addr %s405, 8
        %s407 = scalar_lea.vmem [#allocation4], %s406
        // Predicated region
        $region33: #{tpu_custom_call.1} parent=31 // pred_check
          %p408 = pneg %p123
        $region34: #{tpu_custom_call.1} parent=31 // pred_check_branch
          %410 = sbr.rel (%p408) target = $region36
        $region35: #{tpu_custom_call.1} parent=31 // pred_region
          _
        $region36: #{tpu_custom_call.1} parent=31 // pred_fallthru
          _
        // Predicated region
        $region37: #{tpu_custom_call.1} parent=31 // pred_check
          %p411 = pneg %p151
        $region38: #{tpu_custom_call.1} parent=31 // pred_check_branch
          %413 = sbr.rel (%p411) target = $region40
        $region39: #{tpu_custom_call.1} parent=31 // pred_region
          %s415 = ssub.s32 128, 128
          %416 = vsyncadd %s399, %s415
          %s417 = sadd.s32 %s28, %s27
          %s418 = smul.addr %s417, 128
          %s419 = scalar_lea.hbm %s4, %s418
          %s421 = sshll.u32 %s402, 4
          %s422 = int_to_ptr.vmem [resolvable:$true] %s421
          %424 = dma.vmem_to_hbm [thread:$0]  %s422, 128, %s419, %s399
        $region40: #{tpu_custom_call.1} parent=31 // pred_fallthru
          _
        // Predicated region
        $region41: #{tpu_custom_call.1} parent=31 // pred_check
          %p425 = pneg %p179
        $region42: #{tpu_custom_call.1} parent=31 // pred_check_branch
          %427 = sbr.rel (%p425) target = $region44
        $region43: #{tpu_custom_call.1} parent=31 // pred_region
          %s429 = ssub.s32 128, 128
          %430 = vsyncadd %s404, %s429
          %s431 = sadd.s32 %s28, %s27
          %s432 = smul.addr %s431, 128
          %s433 = scalar_lea.hbm %s5, %s432
          %s435 = sshll.u32 %s407, 4
          %s436 = int_to_ptr.vmem [resolvable:$true] %s435
          %438 = dma.vmem_to_hbm [thread:$0]  %s436, 128, %s433, %s404
        $region44: #{tpu_custom_call.1} parent=31 // pred_fallthru
          _
      $region32: #{tpu_custom_call.1} parent=5 // pred_fallthru
        _
      %p439 = scmp.le.s32.totalorder 2, %s18
      // Predicated region
      $region45: #{tpu_custom_call.1} parent=5 // pred_check
        %p440 = pneg %p439
      $region46: #{tpu_custom_call.1} parent=5 // pred_check_branch
        %442 = sbr.rel (%p440) target = $region48
      $region47: #{tpu_custom_call.1} parent=5 // pred_region
        %s443 = ssub.s32 %s18, 2
        // Predicated region
        $region49: #{tpu_custom_call.1} parent=47 // pred_check
          %p444 = pneg %p129
        $region50: #{tpu_custom_call.1} parent=47 // pred_check_branch
          %446 = sbr.rel (%p444) target = $region52
        $region51: #{tpu_custom_call.1} parent=47 // pred_region
          %p447 = scmp.lt.s32.totalorder %s29, 1
          %s448 = scalar_select %p447, %s29, 1
          %p449 = scmp.lt.s32.totalorder %s30, 0
          %s450 = scalar_select %p449, %s30, 0
          %s451 = sadd.s32 %s450, %s448
          %s452 = smul.addr %s451, 8
          %s453 = scalar_lea.vmem %s3, %s452
        $region52: #{tpu_custom_call.1} parent=47 // pred_fallthru
          _
        // Predicated region
        $region53: #{tpu_custom_call.1} parent=47 // pred_check
          %p454 = pneg %p157
        $region54: #{tpu_custom_call.1} parent=47 // pred_check_branch
          %456 = sbr.rel (%p454) target = $region56
        $region55: #{tpu_custom_call.1} parent=47 // pred_region
          %s457 = sand.u32 %s142, 1
          %s458 = scalar_lea.sflag [#allocation3], %s457
          %s459 = sand.u32 %s142, 1
          %s460 = smul.addr %s459, 8
          %s461 = scalar_lea.vmem [#allocation2], %s460
          %462 = dma.done %s458, 128
        $region56: #{tpu_custom_call.1} parent=47 // pred_fallthru
          _
        // Predicated region
        $region57: #{tpu_custom_call.1} parent=47 // pred_check
          %p463 = pneg %p185
        $region58: #{tpu_custom_call.1} parent=47 // pred_check_branch
          %465 = sbr.rel (%p463) target = $region60
        $region59: #{tpu_custom_call.1} parent=47 // pred_region
          %s466 = sand.u32 %s170, 1
          %s467 = scalar_lea.sflag [#allocation5], %s466
          %s468 = sand.u32 %s170, 1
          %s469 = smul.addr %s468, 8
          %s470 = scalar_lea.vmem [#allocation4], %s469
          %471 = dma.done %s467, 128
        $region60: #{tpu_custom_call.1} parent=47 // pred_fallthru
          _
      $region48: #{tpu_custom_call.1} parent=5 // pred_fallthru
        _
    $region6: #{tpu_custom_call.1} parent=1 // loop_footer
      %s22 = sadd.s32 1, %s18
    $region7: #{tpu_custom_call.1} parent=1 // loop_footer_branch
      %17 = sbr.rel target = $region3
    $region8: #{tpu_custom_call.1} parent=1 // loop_exit
      _
    %472 = vsyncpa [#allocation3], 1
    %s473 = scalar_lea.sflag [#allocation3], 1
    %474 = vsyncpa %s473, 1
    %475 = vsyncpa [#allocation5], 1
    %s476 = scalar_lea.sflag [#allocation5], 1
    %477 = vsyncpa %s476, 1

</llo_original>
